<compile_context>
chip_gen: v7x
topology: tpu7x:2x2x1
jax: 0.10.0
libtpu: 0.0.40
codegen_flags: <defaults>
</compile_context>

<pallas_src>
import jax
import jax.numpy as jnp
from jax.experimental import pallas as pl
from jax.experimental.pallas import tpu as pltpu

NUM_CORES = 2  # engages both TensorCores on v7x; harmless (sequential) on v5e/v6e.
_VMEM_LIMIT = 32 * 1024 * 1024  # explicit scoped-VMEM budget, safe on v5e/v6e/v7x.


def _my_loss_lane_dense(a, b, n, c, tile_rows):
    """C <= 128: pack rows lane-dense into a (R, 128) slab; segmented lane reduce."""
    c_pad = max(1, 1 << (c - 1).bit_length())  # next power of two >= c, divides 128
    rpl = 128 // c_pad                         # original rows per 128-lane slab row
    r_total = (n + rpl - 1) // rpl             # slab rows that contain real data

    def to_slab(x):
        if c_pad != c:
            x = jnp.pad(x, ((0, 0), (0, c_pad - c)))   # zero cols -> norm unchanged
        flat = x.reshape(-1)
        pad = r_total * 128 - flat.shape[0]
        if pad:
            flat = jnp.pad(flat, (0, pad))             # zero rows -> contribute 0
        return flat.reshape(r_total, 128)

    a2, b2 = to_slab(a), to_slab(b)

    # Tile size: ~1 MiB per input buffer by default (memory-bound sweet spot),
    # double-buffered x 2 inputs ~= 4 MiB of pipeline VMEM.
    if tile_rows is None:
        tile_r = r_total if r_total <= 2048 else 2048
    else:
        tile_r = min(tile_rows, r_total)
        assert tile_r == r_total or tile_r % 8 == 0, "tile_rows must be a multiple of 8"

    total_steps = (r_total + tile_r - 1) // tile_r
    spc = (total_steps + NUM_CORES - 1) // NUM_CORES   # steps per core

    def idx(ci, ri):
        # Clamp so a core's surplus iterations re-read the last block (rows are
        # masked out below), never generating a fully out-of-bounds DMA.
        return (jnp.minimum(ci * spc + ri, total_steps - 1), 0)

    def kernel(a_ref, b_ref, out_ref):
        ci = pl.program_id(0)
        ri = pl.program_id(1)

        @pl.when(ri == 0)
        def _init():
            out_ref[...] = jnp.zeros_like(out_ref)

        # Mask slab rows whose *nominal* index is past the real data (ragged tail
        # of the last block, and surplus iterations of the last core).
        row0 = (ci * spc + ri) * tile_r
        row_idx = row0 + jax.lax.broadcasted_iota(jnp.int32, (tile_r, 128), 0)
        d = (a_ref[...] - b_ref[...]).astype(jnp.float32)
        d = jnp.where(row_idx < r_total, d, 0.0)
        sq = d * d

        # Segmented lane reduction by prefix doubling: after log2(c_pad) steps the
        # lane g*c_pad + c_pad - 1 holds the sum of squares of original row g of
        # this slab row (rolls run on the XLU slot; adds on the VPU).
        seg = sq
        s = 1
        while s < c_pad:
            seg = seg + pltpu.roll(seg, shift=s, axis=1)
            s *= 2

        lane = jax.lax.broadcasted_iota(jnp.int32, (tile_r, 128), 1)
        norms = jnp.where((lane & (c_pad - 1)) == (c_pad - 1), jnp.sqrt(seg), 0.0)

        # Lane-wise partial sums accumulated into the resident, lane-dense output
        # block; the single cross-lane reduce happens in the wrapper.
        out_ref[...] += jnp.sum(norms, axis=0, keepdims=True).reshape(1, 1, 128)

    out = pl.pallas_call(
        kernel,
        out_shape=jax.ShapeDtypeStruct((NUM_CORES, 1, 128), jnp.float32),
        grid_spec=pltpu.PrefetchScalarGridSpec(
            num_scalar_prefetch=0,
            grid=(NUM_CORES, spc),
            in_specs=[
                pl.BlockSpec((tile_r, 128), idx),
                pl.BlockSpec((tile_r, 128), idx),
            ],
            out_specs=pl.BlockSpec((1, 1, 128), lambda ci, ri: (ci, 0, 0)),
        ),
        compiler_params=pltpu.CompilerParams(
            dimension_semantics=("parallel", "arbitrary"),
            vmem_limit_bytes=_VMEM_LIMIT,
        ),
    )(a2, b2)
    return jnp.sum(out)


def _my_loss_row_tiled(a, b, n, c, tile_rows):
    """Fallback for C > 128 (already lane-dense along C): row-tiled per-row reduce."""
    if tile_rows is None:
        tgt = max(8, (1 * 1024 * 1024) // (c * 4))   # ~1 MiB tiles
        tile_n = (tgt // 8) * 8
    else:
        tile_n = tile_rows
    if tile_n >= n:
        tile_n = n
    else:
        assert tile_n % 8 == 0, "tile_rows must be a multiple of 8"

    total_steps = (n + tile_n - 1) // tile_n
    spc = (total_steps + NUM_CORES - 1) // NUM_CORES

    def idx(ci, ri):
        return (jnp.minimum(ci * spc + ri, total_steps - 1), 0)

    def kernel(a_ref, b_ref, out_ref):
        ci = pl.program_id(0)
        ri = pl.program_id(1)

        @pl.when(ri == 0)
        def _init():
            out_ref[...] = jnp.zeros_like(out_ref)

        row0 = (ci * spc + ri) * tile_n
        row_idx = row0 + jax.lax.broadcasted_iota(jnp.int32, (tile_n, c), 0)
        d = (a_ref[...] - b_ref[...]).astype(jnp.float32)
        d = jnp.where(row_idx < n, d, 0.0)
        sq_row = jnp.sum(d * d, axis=-1, keepdims=True)   # (tile_n, 1)
        # TODO(synk): per-step scalar accumulate kept in this (rare, C>128) fallback;
        # the wide lane-dense C axis dominates, so it is amortized.
        out_ref[0, 0, 0] += jnp.sum(jnp.sqrt(sq_row))

    out = pl.pallas_call(
        kernel,
        out_shape=jax.ShapeDtypeStruct((NUM_CORES, 1, 1), jnp.float32),
        grid_spec=pltpu.PrefetchScalarGridSpec(
            num_scalar_prefetch=0,
            grid=(NUM_CORES, spc),
            in_specs=[
                pl.BlockSpec((tile_n, c), idx),
                pl.BlockSpec((tile_n, c), idx),
            ],
            out_specs=pl.BlockSpec((1, 1, 1), lambda ci, ri: (ci, 0, 0)),
        ),
        compiler_params=pltpu.CompilerParams(
            dimension_semantics=("parallel", "arbitrary"),
            vmem_limit_bytes=_VMEM_LIMIT,
        ),
    )(a, b)
    return jnp.sum(out)


def my_loss(org_y_prob, modified_y, *, tile_rows=None):
    """sum_i || org_y_prob[i] - modified_y[i] ||_2 for (N, C) inputs -> scalar f32.

    tile_rows (optional): override of the internal row-tile size
      (rows of the (R, 128) slab when C <= 128, rows of (N, C) otherwise);
      must be a multiple of 8 when it does not cover the whole array.
    """
    a = jnp.asarray(org_y_prob)
    b = jnp.asarray(modified_y)
    assert a.ndim == 2 and a.shape == b.shape, "expected matching (N, C) inputs"
    n, c = a.shape
    if c <= 128:
        return _my_loss_lane_dense(a, b, n, c, tile_rows)
    return _my_loss_row_tiled(a, b, n, c, tile_rows)


if __name__ == "__main__":
    key = jax.random.PRNGKey(0)

    def make_probs(k, n, c):
        return jax.nn.softmax(jax.random.normal(k, (n, c), dtype=jnp.float32), axis=-1)

    def ref_loss(a, b):
        d = a.astype(jnp.float32) - b.astype(jnp.float32)
        return jnp.sum(jnp.sqrt(jnp.sum(d * d, axis=-1)))

    cases = [
        dict(n=16, c=10, tile_rows=None),   # CIFAR-10-like: lane-dense path, single tile
        dict(n=519, c=10, tile_rows=16),    # ragged N, multi-step grid, tail masking
        dict(n=20, c=256, tile_rows=8),     # wide-class fallback path (C > 128)
    ]

    for cfg in cases:
        key, ka, kb = jax.random.split(key, 3)
        a = make_probs(ka, cfg["n"], cfg["c"])
        b = make_probs(kb, cfg["n"], cfg["c"])
        got = jax.block_until_ready(my_loss(a, b, tile_rows=cfg["tile_rows"]))
        want = ref_loss(a, b)
        assert jnp.allclose(got, want, rtol=1e-5, atol=1e-5), (cfg, got, want)

    print("KERNEL_OK")
</pallas_src>

<mosaic_0001>
module attributes {stable_mosaic.version = 11 : i64} {
  func.func @kernel(%arg0: i32, %arg1: i32, %arg2: memref<2x128xf32, #tpu.memory_space<vmem>>, %arg3: memref<2x128xf32, #tpu.memory_space<vmem>>, %arg4: memref<1x1x128xf32, #tpu.memory_space<vmem>>) attributes {dimension_semantics = [#tpu.dimension_semantics<parallel>, #tpu.dimension_semantics<arbitrary>], iteration_bounds = array<i64: 2, 1>, scalar_prefetch = 0 : i64, scratch_operands = 0 : i64, tpu.core_type = #tpu.core_type<tc>, window_params = [{transform_indices = @transform_0, window_bounds = array<i64: 2, 128>}, {transform_indices = @transform_1, window_bounds = array<i64: 2, 128>}, {transform_indices = @transform_2, window_bounds = array<i64: 1, 1, 128>}]} {
    %c0_i32 = arith.constant 0 : i32
    %0 = arith.cmpi eq, %arg1, %c0_i32 : i32
    %1 = arith.extui %0 : i1 to i32
    %c0_i32_0 = arith.constant 0 : i32
    %2 = arith.cmpi ne, %1, %c0_i32_0 : i32
    scf.if %2 {
      %cst_16 = arith.constant 0.000000e+00 : f32
      %39 = vector.broadcast %cst_16 : f32 to vector<1x1x128xf32>
      %c0_17 = arith.constant 0 : index
      %c0_18 = arith.constant 0 : index
      %c0_19 = arith.constant 0 : index
      %40 = vector.load %arg4[%c0_17, %c0_18, %c0_19] : memref<1x1x128xf32, #tpu.memory_space<vmem>>, vector<1x1x128xf32>
      tpu.vector_store %arg4[%c0_17, %c0_18, %c0_19], %39 {strides = array<i32>} : memref<1x1x128xf32, #tpu.memory_space<vmem>>, vector<1x1x128xf32>,
    } else {
    }
    %c1_i32 = arith.constant 1 : i32
    %3 = arith.muli %arg0, %c1_i32 : i32
    %4 = arith.addi %3, %arg1 : i32
    %c2_i32 = arith.constant 2 : i32
    %5 = arith.muli %4, %c2_i32 : i32
    %6 = tpu.iota {dimensions = array<i32: 0>} : vector<2x128xi32>
    %7 = vector.broadcast %5 : i32 to vector<2x128xi32>
    %8 = arith.addi %7, %6 : vector<2x128xi32>
    %c0 = arith.constant 0 : index
    %c0_1 = arith.constant 0 : index
    %9 = vector.load %arg2[%c0, %c0_1] : memref<2x128xf32, #tpu.memory_space<vmem>>, vector<2x128xf32>
    %c0_2 = arith.constant 0 : index
    %c0_3 = arith.constant 0 : index
    %10 = vector.load %arg3[%c0_2, %c0_3] : memref<2x128xf32, #tpu.memory_space<vmem>>, vector<2x128xf32>
    %11 = arith.subf %9, %10 : vector<2x128xf32>
    %c2_i32_4 = arith.constant 2 : i32
    %12 = vector.broadcast %c2_i32_4 : i32 to vector<2x128xi32>
    %13 = arith.cmpi slt, %8, %12 : vector<2x128xi32>
    %cst = arith.constant 0.000000e+00 : f32
    %14 = vector.broadcast %cst : f32 to vector<2x128xf32>
    %15 = arith.select %13, %11, %14 : vector<2x128xi1>, vector<2x128xf32>
    %16 = arith.mulf %15, %15 : vector<2x128xf32>
    %c1_i32_5 = arith.constant 1 : i32
    %17 = tpu.dynamic_rotate %16 by %c1_i32_5 dim 1 : vector<2x128xf32>, i32 -> vector<2x128xf32>
    %18 = arith.addf %16, %17 : vector<2x128xf32>
    %c2_i32_6 = arith.constant 2 : i32
    %19 = tpu.dynamic_rotate %18 by %c2_i32_6 dim 1 : vector<2x128xf32>, i32 -> vector<2x128xf32>
    %20 = arith.addf %18, %19 : vector<2x128xf32>
    %c4_i32 = arith.constant 4 : i32
    %21 = tpu.dynamic_rotate %20 by %c4_i32 dim 1 : vector<2x128xf32>, i32 -> vector<2x128xf32>
    %22 = arith.addf %20, %21 : vector<2x128xf32>
    %c8_i32 = arith.constant 8 : i32
    %23 = tpu.dynamic_rotate %22 by %c8_i32 dim 1 : vector<2x128xf32>, i32 -> vector<2x128xf32>
    %24 = arith.addf %22, %23 : vector<2x128xf32>
    %25 = tpu.iota {dimensions = array<i32: 1>} : vector<2x128xi32>
    %c15_i32 = arith.constant 15 : i32
    %26 = vector.broadcast %c15_i32 : i32 to vector<2x128xi32>
    %27 = arith.andi %25, %26 : vector<2x128xi32>
    %c15_i32_7 = arith.constant 15 : i32
    %28 = vector.broadcast %c15_i32_7 : i32 to vector<2x128xi32>
    %29 = arith.cmpi eq, %27, %28 : vector<2x128xi32>
    %30 = math.sqrt %24 : vector<2x128xf32>
    %cst_8 = arith.constant 0.000000e+00 : f32
    %31 = vector.broadcast %cst_8 : f32 to vector<2x128xf32>
    %32 = arith.select %29, %30, %31 : vector<2x128xi1>, vector<2x128xf32>
    %c0_9 = arith.constant 0 : index
    %c0_10 = arith.constant 0 : index
    %c0_11 = arith.constant 0 : index
    %33 = vector.load %arg4[%c0_9, %c0_10, %c0_11] : memref<1x1x128xf32, #tpu.memory_space<vmem>>, vector<1x1x128xf32>
    %cst_12 = arith.constant dense<0.000000e+00> : vector<128xf32>
    %34 = vector.multi_reduction <add>, %32, %cst_12 [0] : vector<2x128xf32> to vector<128xf32>
    %35 = vector.shape_cast %34 : vector<128xf32> to vector<1x128xf32>
    %36 = vector.shape_cast %35 : vector<1x128xf32> to vector<1x1x128xf32>
    %37 = arith.addf %33, %36 : vector<1x1x128xf32>
    %c0_13 = arith.constant 0 : index
    %c0_14 = arith.constant 0 : index
    %c0_15 = arith.constant 0 : index
    %38 = vector.load %arg4[%c0_13, %c0_14, %c0_15] : memref<1x1x128xf32, #tpu.memory_space<vmem>>, vector<1x1x128xf32>
    tpu.vector_store %arg4[%c0_13, %c0_14, %c0_15], %37 {strides = array<i32>} : memref<1x1x128xf32, #tpu.memory_space<vmem>>, vector<1x1x128xf32>,
    return
  }
  func.func @transform_0(%arg0: i32, %arg1: i32) -> (i32, i32) {
    %c1_i32 = arith.constant 1 : i32
    %0 = arith.muli %arg0, %c1_i32 : i32
    %1 = arith.addi %0, %arg1 : i32
    %c0_i32 = arith.constant 0 : i32
    %2 = arith.minsi %1, %c0_i32 : i32
    %c0_i32_0 = arith.constant 0 : i32
    %c0_i32_1 = arith.constant 0 : i32
    return %2, %c0_i32_0 : i32, i32
  }
  func.func @transform_1(%arg0: i32, %arg1: i32) -> (i32, i32) {
    %c1_i32 = arith.constant 1 : i32
    %0 = arith.muli %arg0, %c1_i32 : i32
    %1 = arith.addi %0, %arg1 : i32
    %c0_i32 = arith.constant 0 : i32
    %2 = arith.minsi %1, %c0_i32 : i32
    %c0_i32_0 = arith.constant 0 : i32
    %c0_i32_1 = arith.constant 0 : i32
    return %2, %c0_i32_0 : i32, i32
  }
  func.func @transform_2(%arg0: i32, %arg1: i32) -> (i32, i32, i32) {
    %c0_i32 = arith.constant 0 : i32
    %c0_i32_0 = arith.constant 0 : i32
    %c0_i32_1 = arith.constant 0 : i32
    return %arg0, %c0_i32, %c0_i32_0 : i32, i32, i32
  }
}

</mosaic_0001>

<llo_original>
// kernel: tpu_custom_call.1
$region0: #{tpu_custom_call.1}
  #allocation0 [shape = 'u32[]', space=smem, size = 0x4, offset = 0x4, fixed_abs, tag = 'smem constant byte address 0x4 - core index']
  #allocation1 [shape = 'u32[144,128]{1,0:T(1,128)}', space=vmem, size = 0x12000, scoped, tag = 'internal scratch']
  %s0 = inlined_call_operand.hbm [shape: f32[2,128], index: 0, kind: input, shape index: {}]
  %s1 = inlined_call_operand.vmem [shape: f32[2,128], index: 1, kind: input, shape index: {}]
  %s2 = inlined_call_operand.hbm [shape: f32[2,1,128], index: 2, kind: output, shape index: {}]
  %s3 = sld [smem:[#allocation0]]
  $region49: #{tpu_custom_call.1} parent=0
    _
  %s5 = ssub.s32 1, %s3
  %s6 = scalar_select 0, %s5, %s3
  $region1: #{tpu_custom_call.1} parent=0
    #allocation2 [shape = 'u8[2048]{0}', space=vmem, size = 0x800, scoped, tag = 'input window, operand 0']
    #allocation3 [shape = 's32[2]{0}', space=sflag, size = 0x8, scoped, tag = 'scoped memory for tpu_custom_call.1']
    #allocation4 [shape = 's32[2]{0}', space=sflag, size = 0x8, scoped, tag = 'scoped memory for tpu_custom_call.1']
    #allocation5 [shape = 'u8[1024]{0}', space=vmem, size = 0x400, scoped, tag = 'output window, operand 0']
    %7 = vsyncpa [#allocation3], 0
    %s8 = scalar_lea.sflag [#allocation3], 1
    %9 = vsyncpa %s8, 0
    %10 = vsyncpa [#allocation4], 0
    %s11 = scalar_lea.sflag [#allocation4], 1
    %12 = vsyncpa %s11, 0
    loop: start=0, step=1, limit=4
    $region2: #{tpu_custom_call.1} parent=1 // loop_pre_header
      _
    $region3: #{tpu_custom_call.1} parent=1 // loop_header
      %s14 = sphi 0, %s18
      %p15 = scmp.ge.s32.totalorder %s14, 4
      %s21 = sphi 0, %s33
      %s22 = sphi 0, %s29
      %s23 = sphi 0, %s21
      %s24 = sphi 0, %s22
      %s25 = sphi 0, %s23
      %s26 = sphi 0, %s24
      %s42 = sphi 0, %s44
      %s45 = sphi 0, %s42
      %s46 = sphi 0, %s45
      %s62 = sphi 0, %s46
      %s74 = sphi 0, %s76
      %s77 = sphi 0, %s74
      %s78 = sphi 0, %s77
      %s94 = sphi 0, %s78
      %s100 = sphi 0, %s102
      %s103 = sphi 0, %s100
      %s104 = sphi 0, %s103
      %s120 = sphi 0, %s104
    $region4: #{tpu_custom_call.1} parent=1 // loop_header_branch
      %17 = sbr.rel (%p15) target = $region8
    $region5: #{tpu_custom_call.1} parent=1 // loop_body
      %s19 = ssub.s32 %s14, 1
      %s20 = ssub.s32 %s14, 2
      %s27 = sadd.s32 1, %s22
      %p28 = scmp.ge.s32.totalorder %s27, 1
      %s29 = scalar_select %p28, 0, %s27
      %s30 = sadd.s32 1, %s21
      %s31 = scalar_select %p28, %s30, %s21
      %p32 = scmp.ge.s32.totalorder %s31, 2
      %s33 = scalar_select %p32, 0, %s31
      %s34 = sadd.s32 %s21, %s22
      %p35 = scmp.lt.s32.totalorder %s34, 0
      %s36 = scalar_select %p35, %s34, 0
      %s37 = sadd.s32 %s33, %s29
      %p38 = scmp.lt.s32.totalorder %s37, 0
      %s39 = scalar_select %p38, %s37, 0
      %s40 = ssub.s32 %s36, %s39
      %p41 = scmp.eq.s32.totalorder %s40, 0
      %s43 = sadd.s32 %s42, 1
      %s44 = scalar_select %p41, %s42, %s43
      %p47 = pneg %p41
      %p48 = scmp.eq.s32.totalorder %s14, 1
      %p49 = por %p47, %p48
      %p50 = scmp.ne.s32.totalorder %s42, %s45
      %p51 = scmp.eq.s32.totalorder %s14, 0
      %p52 = por %p50, %p51
      %p53 = scmp.ne.s32.totalorder %s42, %s45
      %p54 = scmp.eq.s32.totalorder %s19, 1
      %p55 = por %p53, %p54
      %p56 = scmp.ne.s32.totalorder %s45, %s46
      %p57 = scmp.eq.s32.totalorder %s19, 0
      %p58 = por %p56, %p57
      %p59 = scmp.ne.s32.totalorder %s45, %s46
      %p60 = scmp.eq.s32.totalorder %s20, 1
      %p61 = por %p59, %p60
      %p63 = scmp.ne.s32.totalorder %s46, %s62
      %p64 = scmp.eq.s32.totalorder %s20, 0
      %p65 = por %p63, %p64
      %s66 = sadd.s32 %s21, %s22
      %p67 = scmp.lt.s32.totalorder %s66, 0
      %s68 = scalar_select %p67, %s66, 0
      %s69 = sadd.s32 %s33, %s29
      %p70 = scmp.lt.s32.totalorder %s69, 0
      %s71 = scalar_select %p70, %s69, 0
      %s72 = ssub.s32 %s68, %s71
      %p73 = scmp.eq.s32.totalorder %s72, 0
      %s75 = sadd.s32 %s74, 1
      %s76 = scalar_select %p73, %s74, %s75
      %p79 = pneg %p73
      %p80 = scmp.eq.s32.totalorder %s14, 1
      %p81 = por %p79, %p80
      %p82 = scmp.ne.s32.totalorder %s74, %s77
      %p83 = scmp.eq.s32.totalorder %s14, 0
      %p84 = por %p82, %p83
      %p85 = scmp.ne.s32.totalorder %s74, %s77
      %p86 = scmp.eq.s32.totalorder %s19, 1
      %p87 = por %p85, %p86
      %p88 = scmp.ne.s32.totalorder %s77, %s78
      %p89 = scmp.eq.s32.totalorder %s19, 0
      %p90 = por %p88, %p89
      %p91 = scmp.ne.s32.totalorder %s77, %s78
      %p92 = scmp.eq.s32.totalorder %s20, 1
      %p93 = por %p91, %p92
      %p95 = scmp.ne.s32.totalorder %s78, %s94
      %p96 = scmp.eq.s32.totalorder %s20, 0
      %p97 = por %p95, %p96
      %s98 = ssub.s32 %s21, %s33
      %p99 = scmp.eq.s32.totalorder %s98, 0
      %s101 = sadd.s32 %s100, 1
      %s102 = scalar_select %p99, %s100, %s101
      %p105 = pneg %p99
      %p106 = scmp.eq.s32.totalorder %s14, 1
      %p107 = por %p105, %p106
      %p108 = scmp.ne.s32.totalorder %s100, %s103
      %p109 = scmp.eq.s32.totalorder %s14, 0
      %p110 = por %p108, %p109
      %p111 = scmp.ne.s32.totalorder %s100, %s103
      %p112 = scmp.eq.s32.totalorder %s19, 1
      %p113 = por %p111, %p112
      %p114 = scmp.ne.s32.totalorder %s103, %s104
      %p115 = scmp.eq.s32.totalorder %s19, 0
      %p116 = por %p114, %p115
      %p117 = scmp.ne.s32.totalorder %s103, %s104
      %p118 = scmp.eq.s32.totalorder %s20, 1
      %p119 = por %p117, %p118
      %p121 = scmp.ne.s32.totalorder %s104, %s120
      %p122 = scmp.eq.s32.totalorder %s20, 0
      %p123 = por %p121, %p122
      %p124 = scmp.le.s32.totalorder 1, %s14
      %p125 = scmp.lt.s32.totalorder %s14, 3
      %p126 = pnand %p124, %p125
      %p127 = pneg %p126
      // Predicated region
      $region9: #{tpu_custom_call.1} parent=5 // pred_check
        _
      $region10: #{tpu_custom_call.1} parent=5 // pred_check_branch
        %129 = sbr.rel (%p126) target = $region12
      $region11: #{tpu_custom_call.1} parent=5 // pred_region
        %s130 = ssub.s32 %s14, 1
      $region12: #{tpu_custom_call.1} parent=5 // pred_fallthru
        _
      %p131 = scmp.lt.s32.totalorder %s14, 2
      // Predicated region
      $region13: #{tpu_custom_call.1} parent=5 // pred_check
        %p132 = pneg %p131
      $region14: #{tpu_custom_call.1} parent=5 // pred_check_branch
        %134 = sbr.rel (%p132) target = $region16
      $region15: #{tpu_custom_call.1} parent=5 // pred_region
        // Predicated region
        $region17: #{tpu_custom_call.1} parent=15 // pred_check
          %p135 = pneg %p52
        $region18: #{tpu_custom_call.1} parent=15 // pred_check_branch
          %137 = sbr.rel (%p135) target = $region20
        $region19: #{tpu_custom_call.1} parent=15 // pred_region
          %s138 = sand.u32 %s42, 1
          %s139 = scalar_lea.sflag [#allocation3], %s138
          %s140 = sand.u32 %s42, 1
          %s141 = smul.addr %s140, 2
          %s142 = scalar_lea.vmem [#allocation2], %s141
          %s143 = sadd.s32 %s21, %s22
          %p144 = scmp.lt.s32.totalorder %s143, 0
          %s145 = scalar_select %p144, %s143, 0
          %s147 = ssub.s32 32, 32
          %148 = vsyncadd %s139, %s147
          %s149 = smul.addr %s145, 32
          %s150 = scalar_lea.hbm %s0, %s149
          %s152 = sshll.u32 %s142, 4
          %s153 = int_to_ptr.vmem [resolvable:$true] %s152
          %155 = dma.hbm_to_vmem [thread:$0]  %s150, 32, %s153, %s139
        $region20: #{tpu_custom_call.1} parent=15 // pred_fallthru
          _
        // Predicated region
        $region21: #{tpu_custom_call.1} parent=15 // pred_check
          %p156 = pneg %p84
        $region22: #{tpu_custom_call.1} parent=15 // pred_check_branch
          %158 = sbr.rel (%p156) target = $region24
        $region23: #{tpu_custom_call.1} parent=15 // pred_region
          %s159 = sadd.s32 %s21, %s22
          %p160 = scmp.lt.s32.totalorder %s159, 0
          %s161 = scalar_select %p160, %s159, 0
          %p162 = scmp.lt.s32.totalorder %s161, 0
          %s163 = scalar_select %p162, %s161, 0
          %s164 = smul.addr %s163, 2
          %s165 = scalar_lea.vmem %s1, %s164
          %s166 = sadd.s32 %s21, %s22
          %p167 = scmp.lt.s32.totalorder %s166, 0
          %s168 = scalar_select %p167, %s166, 0
        $region24: #{tpu_custom_call.1} parent=15 // pred_fallthru
          _
      $region16: #{tpu_custom_call.1} parent=5 // pred_fallthru
        _
      %p169 = scmp.le.s32.totalorder 1, %s14
      %p170 = scmp.lt.s32.totalorder %s14, 3
      %p171 = pnand %p169, %p170
      %p172 = pneg %p171
      // Predicated region
      $region25: #{tpu_custom_call.1} parent=5 // pred_check
        _
      $region26: #{tpu_custom_call.1} parent=5 // pred_check_branch
        %174 = sbr.rel (%p171) target = $region28
      $region27: #{tpu_custom_call.1} parent=5 // pred_region
        %s175 = ssub.s32 %s14, 1
        %s176 = sand.u32 %s45, 1
        %s177 = scalar_lea.sflag [#allocation3], %s176
        %s178 = sand.u32 %s45, 1
        %s179 = smul.addr %s178, 2
        %s180 = scalar_lea.vmem [#allocation2], %s179
        // Predicated region
        $region29: #{tpu_custom_call.1} parent=27 // pred_check
          %p181 = pneg %p58
        $region30: #{tpu_custom_call.1} parent=27 // pred_check_branch
          %183 = sbr.rel (%p181) target = $region32
        $region31: #{tpu_custom_call.1} parent=27 // pred_region
          %184 = dma.done %s177, 32
        $region32: #{tpu_custom_call.1} parent=27 // pred_fallthru
          _
        %s185 = sand.u32 %s45, 1
        %s186 = scalar_lea.sflag [#allocation3], %s185
        %s187 = sand.u32 %s45, 1
        %s188 = smul.addr %s187, 2
        %s189 = scalar_lea.vmem [#allocation2], %s188
        %p190 = pneg %p58
        %p191 = pneg %p55
        %s192 = sadd.s32 %s23, %s24
        %p193 = scmp.lt.s32.totalorder %s192, 0
        %s194 = scalar_select %p193, %s192, 0
        %p195 = scmp.lt.s32.totalorder %s194, 0
        %s196 = scalar_select %p195, %s194, 0
        %s197 = smul.addr %s196, 2
        %s198 = scalar_lea.vmem %s1, %s197
        %p199 = pneg %p90
        %p200 = pneg %p87
        %p201 = pneg %p116
        %p202 = pneg %p113
        %s203 = sand.u32 %s103, 1
        %s204 = scalar_lea.sflag [#allocation4], %s203
        %s205 = sand.u32 %s103, 1
        %s206 = scalar_lea.vmem [#allocation5], %s205
        %s207 = sadd.s32 %s23, %s24
        %p208 = scmp.lt.s32.totalorder %s207, 0
        %s209 = scalar_select %p208, %s207, 0
        %s210 = sadd.s32 %s23, %s24
        %p211 = scmp.lt.s32.totalorder %s210, 0
        %s212 = scalar_select %p211, %s210, 0
        %p213 = scmp.lt.s32.totalorder %s212, 0
        %s214 = scalar_select %p213, %s212, 0
        %s215 = smul.addr %s214, 2
        %s216 = scalar_lea.vmem %s1, %s215
        %s217 = sadd.s32 %s23, %s24
        %p218 = scmp.lt.s32.totalorder %s217, 0
        %s219 = scalar_select %p218, %s217, 0
        %p220 = scmp.eq.s32.totalorder %s24, 0
        // Predicated region
        $region33: #{tpu_custom_call.1} parent=27 // pred_check
          %p221 = pneg %p220
        $region34: #{tpu_custom_call.1} parent=27 // pred_check_branch
          %223 = sbr.rel (%p221) target = $region36
        $region35: #{tpu_custom_call.1} parent=27 // pred_region
          %224 = vst [vmem:[%s206] sm:$0x1] 0.0
        $region36: #{tpu_custom_call.1} parent=27 // pred_fallthru
          _
        %s225 = sadd.s32 %s23, %s24
        %s226 = smul.u32 %s225, 2
        %v227 = vlaneseq
        %v228 = vshrl.u32 %v227, 7
        %v229 = vstv %s226
        %v230 = vadd.s32 %v229, %v228
        %v231 = vld [vmem:[%s180] sm:$0x3]
        %v232 = vld [vmem:[%s216] sm:$0x3]
        %v233 = vsub.f32 %v231, %v232
        %vm234 = vcmp.lt.s32.totalorder %v230, 2
        %v235 = vsel %vm234, %v233, 0.0
        %v236 = vmul.f32 %v235, %v235
        %237 = vrot.lane.b32.xlu0 %v236, 1
        %v238 = vpop.permute.xlu0 %237
        %v239 = vadd.f32 %v236, %v238
        %240 = vrot.lane.b32.xlu0 %v239, 2
        %v241 = vpop.permute.xlu0 %240
        %v242 = vadd.f32 %v239, %v241
        %243 = vrot.lane.b32.xlu0 %v242, 4
        %v244 = vpop.permute.xlu0 %243
        %v245 = vadd.f32 %v242, %v244
        %246 = vrot.lane.b32.xlu0 %v245, 8
        %v247 = vpop.permute.xlu0 %246
        %v248 = vadd.f32 %v245, %v247
        %v249 = vlaneseq
        %v250 = vand.u32 %v249, 127
        %v251 = vand.u32 %v250, 15
        %vm252 = vcmp.eq.s32.totalorder %v251, 15
        %v253 = vrsqrt.pop %v248
        %v254 = vmul.f32 %v248, %v253
        %vm255 = vcmp.eq.f32.partialorder %v248, inf
        %v256 = vsel %vm255, %v248, %v254
        %vm257 = vcmp.eq.f32.partialorder %v248, 0.0
        %v258 = vand.u32 %v248, 2147483648
        %v259 = vsel %vm257, %v258, %v256
        %v260 = vsel %vm252, %v259, 0.0
        %v261 = vld [vmem:[%s206] sm:$0x1]
        %vm262 = vcmask 1041408
        %v263 = vsel %vm262, %v260, 0.0
        %v264 = vrot.slane %v263, 4
        %v265 = vadd.f32 %v263, %v264
        %v266 = vrot.slane %v265, 2
        %v267 = vadd.f32 %v265, %v266
        %v268 = vrot.slane %v267, 1
        %v269 = vadd.f32 %v267, %v268
        %v270 = vadd.f32 %v261, %v269
        %271 = vst [vmem:[%s206] sm:$0x1] %v270
        %s272 = sand.u32 %s103, 1
        %s273 = scalar_lea.sflag [#allocation4], %s272
        %s274 = sand.u32 %s103, 1
        %s275 = scalar_lea.vmem [#allocation5], %s274
        // Predicated region
        $region37: #{tpu_custom_call.1} parent=27 // pred_check
          %p276 = pneg %p113
        $region38: #{tpu_custom_call.1} parent=27 // pred_check_branch
          %278 = sbr.rel (%p276) target = $region40
        $region39: #{tpu_custom_call.1} parent=27 // pred_region
          %s280 = ssub.s32 16, 16
          %281 = vsyncadd %s273, %s280
          %s282 = smul.addr %s23, 16
          %s283 = scalar_lea.hbm %s2, %s282
          %s285 = sshll.u32 %s275, 4
          %s286 = int_to_ptr.vmem [resolvable:$true] %s285
          %288 = dma.vmem_to_hbm [thread:$0]  %s286, 16, %s283, %s273
        $region40: #{tpu_custom_call.1} parent=27 // pred_fallthru
          _
      $region28: #{tpu_custom_call.1} parent=5 // pred_fallthru
        _
      %p289 = scmp.le.s32.totalorder 2, %s14
      // Predicated region
      $region41: #{tpu_custom_call.1} parent=5 // pred_check
        %p290 = pneg %p289
      $region42: #{tpu_custom_call.1} parent=5 // pred_check_branch
        %292 = sbr.rel (%p290) target = $region44
      $region43: #{tpu_custom_call.1} parent=5 // pred_region
        %s293 = ssub.s32 %s14, 2
        // Predicated region
        $region45: #{tpu_custom_call.1} parent=43 // pred_check
          %p294 = pneg %p119
        $region46: #{tpu_custom_call.1} parent=43 // pred_check_branch
          %296 = sbr.rel (%p294) target = $region48
        $region47: #{tpu_custom_call.1} parent=43 // pred_region
          %s297 = sand.u32 %s104, 1
          %s298 = scalar_lea.sflag [#allocation4], %s297
          %s299 = sand.u32 %s104, 1
          %s300 = scalar_lea.vmem [#allocation5], %s299
          %301 = dma.done %s298, 16
        $region48: #{tpu_custom_call.1} parent=43 // pred_fallthru
          _
      $region44: #{tpu_custom_call.1} parent=5 // pred_fallthru
        _
    $region6: #{tpu_custom_call.1} parent=1 // loop_footer
      %s18 = sadd.s32 1, %s14
    $region7: #{tpu_custom_call.1} parent=1 // loop_footer_branch
      %13 = sbr.rel target = $region3
    $region8: #{tpu_custom_call.1} parent=1 // loop_exit
      _
    %302 = vsyncpa [#allocation3], 1
    %s303 = scalar_lea.sflag [#allocation3], 1
    %304 = vsyncpa %s303, 1
    %305 = vsyncpa [#allocation4], 1
    %s306 = scalar_lea.sflag [#allocation4], 1
    %307 = vsyncpa %s306, 1

</llo_original>
